<compile_context>
chip_gen: v5e
topology: v5e:2x2
jax: 0.10.0
libtpu: 0.0.40
codegen_flags: <defaults>
</compile_context>

<pallas_src>
import functools

import jax
import jax.numpy as jnp
from jax.experimental import pallas as pl
from jax.experimental.pallas import tpu as pltpu


def _round_up(n, m):
    return ((n + m - 1) // m) * m


def _stage1_kernel(x_ref, w1_ref, b1_ref, w2_ref, b2_ref, o_ref):
    # fc1: (TB, D) @ (D, Hp) on the MXU, f32 accumulate.
    h = jnp.dot(x_ref[...], w1_ref[...], preferred_element_type=jnp.float32)
    # bias + ReLU (padded columns stay exactly 0).
    h = jnp.maximum(h + b1_ref[...], 0.0)
    # dropout1: identity (eval-mode semantics).
    # fc2 as VPU multiply + XLU lane reduction (no second MXU pass); padded
    # w2 columns are 0 so they contribute nothing to the sum.
    logit = jnp.sum(h * w2_ref[...], axis=-1, keepdims=True) + b2_ref[...]
    # sigmoid with the divide on the EUP.
    o_ref[...] = pl.reciprocal(1.0 + jnp.exp(-logit), approx=False).astype(o_ref.dtype)


def prepare_params(w1, b1, w2, b2, lane_pad=128):
    """One-time parameter prep (hoisted out of the per-call path).

    w1: (H, D), b1: (H,), w2: (1, H), b2: (1,)  ->  padded, pre-transposed tensors.
    """
    H, D = w1.shape
    Hp = _round_up(H, lane_pad)  # 239 -> 256
    w1t = jnp.zeros((D, Hp), jnp.float32).at[:, :H].set(w1.T.astype(jnp.float32))
    b1r = jnp.zeros((1, Hp), jnp.float32).at[:, :H].set(b1.astype(jnp.float32))
    w2r = jnp.zeros((1, Hp), jnp.float32).at[:, :H].set(
        w2.reshape(1, H).astype(jnp.float32))
    b2r = b2.reshape(1, 1).astype(jnp.float32)
    return w1t, b1r, w2r, b2r


@functools.partial(jax.jit, static_argnames=("tile_b",))
def stage1_classifier(x, w1t, b1r, w2r, b2r, *, tile_b=512):
    """x: (B, D) f32; prepared params from prepare_params(). Returns (B, 1)."""
    B, D = x.shape
    Hp = w1t.shape[1]

    # Batch tile: multiple of 8 sublanes, capped at tile_b for VMEM headroom
    # (comfortably within v7x's 64 MiB physical VMEM at these feature sizes).
    tb = min(tile_b, _round_up(B, 8))
    b_pad = _round_up(B, tb)
    if b_pad != B:
        x = jnp.pad(x, ((0, b_pad - B), (0, 0)))
    grid = (b_pad // tb,)

    out = pl.pallas_call(
        _stage1_kernel,
        out_shape=jax.ShapeDtypeStruct((b_pad, 1), jnp.float32),
        grid_spec=pltpu.PrefetchScalarGridSpec(
            num_scalar_prefetch=0,
            grid=grid,
            in_specs=[
                pl.BlockSpec((tb, D), lambda i: (i, 0)),   # x: batch tile
                pl.BlockSpec((D, Hp), lambda i: (0, 0)),   # w1t: VMEM-resident
                pl.BlockSpec((1, Hp), lambda i: (0, 0)),   # b1:  VMEM-resident
                pl.BlockSpec((1, Hp), lambda i: (0, 0)),   # w2 row: VMEM-resident
                pl.BlockSpec((1, 1), lambda i: (0, 0)),    # b2
            ],
            out_specs=pl.BlockSpec((tb, 1), lambda i: (i, 0)),
        ),
        compiler_params=pltpu.CompilerParams(
            dimension_semantics=("parallel",),
        ),
    )(x, w1t, b1r, w2r, b2r)

    return out[:B]


def _ref_forward(x, w1, b1, w2, b2):
    h = jnp.maximum(x @ w1.T + b1, 0.0)
    return jax.nn.sigmoid(h @ w2.T + b2)


if __name__ == "__main__":
    key = jax.random.PRNGKey(0)
    k_x, k_w1, k_b1, k_w2, k_b2 = jax.random.split(key, 5)

    batch = 8
    input_size = 32
    hidden_size = 239  # matches nn.Linear(input_size, 239)

    x = jax.random.normal(k_x, (batch, input_size), dtype=jnp.float32)

    # Deterministic parameter init (uniform, PyTorch-Linear-like bounds).
    bound1 = 1.0 / (input_size ** 0.5)
    w1 = jax.random.uniform(k_w1, (hidden_size, input_size),
                            minval=-bound1, maxval=bound1, dtype=jnp.float32)
    b1 = jax.random.uniform(k_b1, (hidden_size,),
                            minval=-bound1, maxval=bound1, dtype=jnp.float32)
    bound2 = 1.0 / (hidden_size ** 0.5)
    w2 = jax.random.uniform(k_w2, (1, hidden_size),
                            minval=-bound2, maxval=bound2, dtype=jnp.float32)
    b2 = jax.random.uniform(k_b2, (1,),
                            minval=-bound2, maxval=bound2, dtype=jnp.float32)

    # Parameter prep happens once, outside the per-call path.
    params = prepare_params(w1, b1, w2, b2)

    out = stage1_classifier(x, *params)
    out = jax.block_until_ready(out)

    ref = _ref_forward(x, w1, b1, w2, b2)
    assert out.shape == (batch, 1), out.shape
    assert jnp.allclose(out, ref, atol=1e-5, rtol=1e-5), "mismatch vs reference"

    print("KERNEL_OK")
</pallas_src>

<mosaic_0001>
module attributes {stable_mosaic.version = 11 : i64} {
  func.func @_stage1_kernel(%arg0: i32, %arg1: memref<8x32xf32, #tpu.memory_space<vmem>>, %arg2: memref<32x256xf32, #tpu.memory_space<vmem>>, %arg3: memref<1x256xf32, #tpu.memory_space<vmem>>, %arg4: memref<1x256xf32, #tpu.memory_space<vmem>>, %arg5: memref<1x1xf32, #tpu.memory_space<vmem>>, %arg6: memref<8x1xf32, #tpu.memory_space<vmem>>) attributes {dimension_semantics = [#tpu.dimension_semantics<parallel>], iteration_bounds = array<i64: 1>, scalar_prefetch = 0 : i64, scratch_operands = 0 : i64, tpu.core_type = #tpu.core_type<tc>, window_params = [{transform_indices = @transform_0, window_bounds = array<i64: 8, 32>}, {pipeline_mode = #tpu.pipeline_mode<synchronous>, transform_indices = @transform_1, window_bounds = array<i64: 32, 256>}, {pipeline_mode = #tpu.pipeline_mode<synchronous>, transform_indices = @transform_2, window_bounds = array<i64: 1, 256>}, {pipeline_mode = #tpu.pipeline_mode<synchronous>, transform_indices = @transform_3, window_bounds = array<i64: 1, 256>}, {pipeline_mode = #tpu.pipeline_mode<synchronous>, transform_indices = @transform_4, window_bounds = array<i64: 1, 1>}, {transform_indices = @transform_5, window_bounds = array<i64: 8, 1>}]} {
    %c0 = arith.constant 0 : index
    %c0_0 = arith.constant 0 : index
    %0 = vector.load %arg1[%c0, %c0_0] : memref<8x32xf32, #tpu.memory_space<vmem>>, vector<8x32xf32>
    %c0_1 = arith.constant 0 : index
    %c0_2 = arith.constant 0 : index
    %1 = vector.load %arg2[%c0_1, %c0_2] : memref<32x256xf32, #tpu.memory_space<vmem>>, vector<32x256xf32>
    %cst = arith.constant dense<0.000000e+00> : vector<8x256xf32>
    %2 = tpu.matmul %0, %1, %cst {dimension_numbers = #tpu.dot_dimension_numbers<[1], [0], [0], [1], [0, 0, 1, 1], [], []>} : vector<8x32xf32>, vector<32x256xf32>, vector<8x256xf32> -> vector<8x256xf32>
    %c0_3 = arith.constant 0 : index
    %c0_4 = arith.constant 0 : index
    %3 = vector.load %arg3[%c0_3, %c0_4] : memref<1x256xf32, #tpu.memory_space<vmem>>, vector<1x256xf32>
    %4 = vector.broadcast %3 : vector<1x256xf32> to vector<8x256xf32>
    %5 = arith.addf %2, %4 : vector<8x256xf32>
    %cst_5 = arith.constant 0.000000e+00 : f32
    %6 = vector.broadcast %cst_5 : f32 to vector<8x256xf32>
    %7 = arith.maximumf %5, %6 : vector<8x256xf32>
    %c0_6 = arith.constant 0 : index
    %c0_7 = arith.constant 0 : index
    %8 = vector.load %arg4[%c0_6, %c0_7] : memref<1x256xf32, #tpu.memory_space<vmem>>, vector<1x256xf32>
    %9 = vector.broadcast %8 : vector<1x256xf32> to vector<8x256xf32>
    %10 = arith.mulf %7, %9 : vector<8x256xf32>
    %cst_8 = arith.constant dense<0.000000e+00> : vector<8xf32>
    %11 = vector.multi_reduction <add>, %10, %cst_8 [1] : vector<8x256xf32> to vector<8xf32>
    %12 = vector.shape_cast %11 : vector<8xf32> to vector<8x1xf32>
    %c0_9 = arith.constant 0 : index
    %c0_10 = arith.constant 0 : index
    %13 = vector.load %arg5[%c0_9, %c0_10] : memref<1x1xf32, #tpu.memory_space<vmem>>, vector<1x1xf32>
    %14 = vector.broadcast %13 : vector<1x1xf32> to vector<8x1xf32>
    %15 = arith.addf %12, %14 : vector<8x1xf32>
    %cst_11 = arith.constant 0.000000e+00 : f32
    %16 = vector.broadcast %cst_11 : f32 to vector<8x1xf32>
    %17 = arith.subf %16, %15 : vector<8x1xf32>
    %18 = math.exp %17 : vector<8x1xf32>
    %cst_12 = arith.constant 1.000000e+00 : f32
    %19 = vector.broadcast %cst_12 : f32 to vector<8x1xf32>
    %20 = arith.addf %19, %18 : vector<8x1xf32>
    %21 = tpu.reciprocal %20 : vector<8x1xf32> -> vector<8x1xf32>
    %c0_13 = arith.constant 0 : index
    %c0_14 = arith.constant 0 : index
    %22 = vector.load %arg6[%c0_13, %c0_14] : memref<8x1xf32, #tpu.memory_space<vmem>>, vector<8x1xf32>
    tpu.vector_store %arg6[%c0_13, %c0_14], %21 {strides = array<i32>} : memref<8x1xf32, #tpu.memory_space<vmem>>, vector<8x1xf32>,
    return
  }
  func.func @transform_0(%arg0: i32) -> (i32, i32) {
    %c0_i32 = arith.constant 0 : i32
    %c0_i32_0 = arith.constant 0 : i32
    return %arg0, %c0_i32 : i32, i32
  }
  func.func @transform_1(%arg0: i32) -> (i32, i32) {
    %c0_i32 = arith.constant 0 : i32
    %c0_i32_0 = arith.constant 0 : i32
    %c0_i32_1 = arith.constant 0 : i32
    return %c0_i32, %c0_i32_0 : i32, i32
  }
  func.func @transform_2(%arg0: i32) -> (i32, i32) {
    %c0_i32 = arith.constant 0 : i32
    %c0_i32_0 = arith.constant 0 : i32
    %c0_i32_1 = arith.constant 0 : i32
    return %c0_i32, %c0_i32_0 : i32, i32
  }
  func.func @transform_3(%arg0: i32) -> (i32, i32) {
    %c0_i32 = arith.constant 0 : i32
    %c0_i32_0 = arith.constant 0 : i32
    %c0_i32_1 = arith.constant 0 : i32
    return %c0_i32, %c0_i32_0 : i32, i32
  }
  func.func @transform_4(%arg0: i32) -> (i32, i32) {
    %c0_i32 = arith.constant 0 : i32
    %c0_i32_0 = arith.constant 0 : i32
    %c0_i32_1 = arith.constant 0 : i32
    return %c0_i32, %c0_i32_0 : i32, i32
  }
  func.func @transform_5(%arg0: i32) -> (i32, i32) {
    %c0_i32 = arith.constant 0 : i32
    %c0_i32_0 = arith.constant 0 : i32
    return %arg0, %c0_i32 : i32, i32
  }
}

</mosaic_0001>

<llo_original>
// kernel: stage1_classifier.1
$region0: #{stage1_classifier.1}
  #allocation0 [shape = 'u32[]', space=smem, size = 0x4, offset = 0x4, fixed_abs, tag = 'smem constant byte address 0x4 - core index']
  #allocation1 [shape = 'u32[72,128]{1,0:T(1,128)}', space=vmem, size = 0x9000, scoped, tag = 'internal scratch']
  #allocation2 [shape = 'f32[1,1]{1,0:T(1,128)S(1)}', space=vmem, size = 0x200, scoped, tag = 'scoped memory for stage1_classifier.1']
  %s0 = inlined_call_operand.hbm [shape: f32[8,32], index: 0, kind: input, shape index: {}]
  %s1 = inlined_call_operand.hbm [shape: f32[32,256], index: 1, kind: input, shape index: {}]
  %s2 = inlined_call_operand.vmem [shape: f32[1,256], index: 2, kind: input, shape index: {}]
  %s3 = inlined_call_operand.vmem [shape: f32[1,256], index: 3, kind: input, shape index: {}]
  %s4 = inlined_call_operand.<no memory space> [shape: f32[1,1], index: 4, kind: input, shape index: {}]
  %s5 = inlined_call_operand.vmem [shape: f32[8,1], index: 5, kind: output, shape index: {}]
  %s6 = sld [smem:[#allocation0]]
  $region38: #{stage1_classifier.1} parent=0
    _
  %s8 = ssub.s32 1, %s6
  %s9 = scalar_select 0, %s8, %s6
  %v10 = vstv %s4
  %11 = vst [vmem:[#allocation2] sm:$0x1] %v10
  $region1: #{stage1_classifier.1} parent=0
    #allocation3 [shape = 'u8[4096]{0}', space=vmem, size = 0x1000, scoped, tag = 'input window, operand 0, single buffered']
    #allocation4 [shape = 's32[1]{0}', space=sflag, size = 0x4, scoped, tag = 'scoped memory for stage1_classifier.1']
    #allocation5 [shape = 'u8[32768]{0}', space=vmem, size = 0x8000, scoped, tag = 'input window, operand 1, single buffered']
    #allocation6 [shape = 's32[1]{0}', space=sflag, size = 0x4, scoped, tag = 'scoped memory for stage1_classifier.1']
    %12 = vsyncpa [#allocation4], 0
    %13 = vsyncpa [#allocation6], 0
    // Predicated region
    $region2: #{stage1_classifier.1} parent=1 // pred_check
      _
    $region3: #{stage1_classifier.1} parent=1 // pred_check_branch
      %15 = sbr.rel (0) target = $region5
    $region4: #{stage1_classifier.1} parent=1 // pred_region
      %17 = vsyncadd [#allocation4], 0
      %s19 = sshll.u32 %s0, 4
      %s20 = int_to_ptr.hbm [resolvable:$true] %s19
      %s21 = sshll.u32 [#allocation3], 4
      %s22 = int_to_ptr.vmem [resolvable:$true] %s21
      %24 = dma.hbm_to_vmem [thread:$0]  %s20, 128, %s22, [#allocation4]
    $region5: #{stage1_classifier.1} parent=1 // pred_fallthru
      _
    // Predicated region
    $region6: #{stage1_classifier.1} parent=1 // pred_check
      _
    $region7: #{stage1_classifier.1} parent=1 // pred_check_branch
      %26 = sbr.rel (0) target = $region9
    $region8: #{stage1_classifier.1} parent=1 // pred_region
      %28 = vsyncadd [#allocation6], 0
      %s29 = sshll.u32 %s1, 4
      %s30 = int_to_ptr.hbm [resolvable:$true] %s29
      %s31 = sshll.u32 [#allocation5], 4
      %s32 = int_to_ptr.vmem [resolvable:$true] %s31
      %37 = dma.hbm_to_vmem [thread:$0]  %s30, 1024, %s32, [#allocation6], 256, 256, 16
    $region9: #{stage1_classifier.1} parent=1 // pred_fallthru
      _
    // Predicated region
    $region10: #{stage1_classifier.1} parent=1 // pred_check
      _
    $region11: #{stage1_classifier.1} parent=1 // pred_check_branch
      %39 = sbr.rel (0) target = $region13
    $region12: #{stage1_classifier.1} parent=1 // pred_region
      _
    $region13: #{stage1_classifier.1} parent=1 // pred_fallthru
      _
    // Predicated region
    $region14: #{stage1_classifier.1} parent=1 // pred_check
      _
    $region15: #{stage1_classifier.1} parent=1 // pred_check_branch
      %41 = sbr.rel (0) target = $region17
    $region16: #{stage1_classifier.1} parent=1 // pred_region
      _
    $region17: #{stage1_classifier.1} parent=1 // pred_fallthru
      _
    // Predicated region
    $region18: #{stage1_classifier.1} parent=1 // pred_check
      _
    $region19: #{stage1_classifier.1} parent=1 // pred_check_branch
      %43 = sbr.rel (0) target = $region21
    $region20: #{stage1_classifier.1} parent=1 // pred_region
      _
    $region21: #{stage1_classifier.1} parent=1 // pred_fallthru
      _
    // Predicated region
    $region22: #{stage1_classifier.1} parent=1 // pred_check
      _
    $region23: #{stage1_classifier.1} parent=1 // pred_check_branch
      %45 = sbr.rel (0) target = $region25
    $region24: #{stage1_classifier.1} parent=1 // pred_region
      %47 = dma.done [#allocation4], 128
    $region25: #{stage1_classifier.1} parent=1 // pred_fallthru
      _
    // Predicated region
    $region26: #{stage1_classifier.1} parent=1 // pred_check
      _
    $region27: #{stage1_classifier.1} parent=1 // pred_check_branch
      %49 = sbr.rel (0) target = $region29
    $region28: #{stage1_classifier.1} parent=1 // pred_region
      %51 = dma.done [#allocation6], 1024
    $region29: #{stage1_classifier.1} parent=1 // pred_fallthru
      _
    %v52 = vld [vmem:[#allocation3] sm:$0xff]
    %v53 = vld [vmem:[#allocation5] sm:$0xff]
    %v54 = vld [vmem:[#allocation5 + $0x8] sm:$0xff]
    %v55 = vld [vmem:[#allocation5 + $0x10] sm:$0xff]
    %v56 = vld [vmem:[#allocation5 + $0x18] sm:$0xff]
    %v57 = vld [vmem:[#allocation5 + $0x20] sm:$0xff]
    %v58 = vld [vmem:[#allocation5 + $0x28] sm:$0xff]
    %v59 = vld [vmem:[#allocation5 + $0x30] sm:$0xff]
    %v60 = vld [vmem:[#allocation5 + $0x38] sm:$0xff]
    %v61 = vld [vmem:[%s2] sm:$0x3]
    %v63 = vperm.slane %v61, 0
    %v64 = vperm.slane %v61, 1
    %vm67 = vcmask 261120
    %v69 = vsel %vm67, %v52, 0
    %71 = vmatpush.msra.mxu0 0.0
    %72 = vmatpush.msra.mxu0 0.0
    %73 = vmatpush.msra.mxu0 0.0
    %74 = vmatpush.msra.mxu0 0.0
    %75 = vmatpush.msra.mxu0 0.0
    %76 = vmatpush.msra.mxu0 0.0
    %77 = vmatpush.msra.mxu0 0.0
    %78 = vmatpush.msra.mxu0 0.0
    %79 = vmatpush.msra.mxu0 0.0
    %80 = vmatpush.msra.mxu0 0.0
    %81 = vmatpush.msra.mxu0 0.0
    %82 = vmatpush.msra.mxu0 0.0
    %83 = vmatpush.msra.mxu0 %v59
    %84 = vmatpush.msra.mxu0 %v57
    %85 = vmatpush.msra.mxu0 %v55
    %86 = vmatpush.msra.mxu0 %v53
    %87 = vmatmul.f32.gmra.mxu0 %v69
    %v88 = vpop.f32.mrf.mxu0
    %v89 = vadd.f32 %v63, %v88
    %90 = vdwg.mxu0
    %91 = vmatpush.msra.mxu0 0.0
    %92 = vmatpush.msra.mxu0 0.0
    %93 = vmatpush.msra.mxu0 0.0
    %94 = vmatpush.msra.mxu0 0.0
    %95 = vmatpush.msra.mxu0 0.0
    %96 = vmatpush.msra.mxu0 0.0
    %97 = vmatpush.msra.mxu0 0.0
    %98 = vmatpush.msra.mxu0 0.0
    %99 = vmatpush.msra.mxu0 0.0
    %100 = vmatpush.msra.mxu0 0.0
    %101 = vmatpush.msra.mxu0 0.0
    %102 = vmatpush.msra.mxu0 0.0
    %103 = vmatpush.msra.mxu0 %v60
    %104 = vmatpush.msra.mxu0 %v58
    %105 = vmatpush.msra.mxu0 %v56
    %106 = vmatpush.msra.mxu0 %v54
    %107 = vmatmul.f32.gmra.mxu0 %v69
    %v108 = vpop.f32.mrf.mxu0
    %v109 = vadd.f32 %v64, %v108
    %110 = vdwg.mxu0
    %v111 = vmax.f32 %v89, 0.0
    %v112 = vmax.f32 %v109, 0.0
    %v113 = vld [vmem:[%s3] sm:$0x3]
    %v115 = vperm.slane %v113, 0
    %v116 = vperm.slane %v113, 1
    %v119 = vmul.f32 %v111, %v115
    %v120 = vmul.f32 %v112, %v116
    %v121 = vadd.f32 %v119, %v120
    %122 = vadd.xlane.f32.xlu0 %v121
    %v123 = vpop.xlane.xlu0 %122
    %v124 = vld [vmem:[#allocation2] sm:$0x1]
    %v126 = vperm.slane %v124, 0
    %v128 = vadd.f32 %v123, %v126
    %v129 = vsub.f32 0.0, %v128
    %v130 = vmul.f32 %v129, 1.442695
    %v131 = vpow.pop %v130
    %v132 = vadd.f32 %v131, 1.0
    %v133 = vrcp.pop %v132
    %v134 = vmul.f32 %v132, %v133
    %v135 = vsub.f32 1.0, %v134
    %v136 = vmul.f32 %v133, %v135
    %v137 = vadd.f32 %v133, %v136
    %vm138 = vweird.f32 %v132
    %vm139 = vweird.f32 %v133
    %vm140 = vmor %vm138, %vm139
    %v141 = vsel %vm140, %v133, %v137
    %v142 = vand.u32 2147483647, %v132
    %vm143 = vcmp.eq.f32.partialorder %v142, 8.507059e+37
    %v144 = vand.u32 %v132, 2147483648
    %v145 = vor.u32 1.1754944e-38, %v144
    %v146 = vsel %vm143, %v145, %v141
    %vm147 = vcmask 7168
    %148 = vst.msk [vmem:[%s5] sm:$0xff] %vm147, %v146
    // Predicated region
    $region30: #{stage1_classifier.1} parent=1 // pred_check
      _
    $region31: #{stage1_classifier.1} parent=1 // pred_check_branch
      %150 = sbr.rel (0) target = $region33
    $region32: #{stage1_classifier.1} parent=1 // pred_region
      _
    $region33: #{stage1_classifier.1} parent=1 // pred_fallthru
      _
    // Predicated region
    $region34: #{stage1_classifier.1} parent=1 // pred_check
      _
    $region35: #{stage1_classifier.1} parent=1 // pred_check_branch
      %152 = sbr.rel (0) target = $region37
    $region36: #{stage1_classifier.1} parent=1 // pred_region
      _
    $region37: #{stage1_classifier.1} parent=1 // pred_fallthru
      _
    %153 = vsyncpa [#allocation4], 1
    %154 = vsyncpa [#allocation6], 1

</llo_original>
